<compile_context>
chip_gen: v6e
topology: v6e:2x2x1
jax: 0.10.0
libtpu: 0.0.40
codegen_flags: <defaults>
</compile_context>

<pallas_src>
import numpy as np
import jax
import jax.numpy as jnp
from jax.experimental import pallas as pl
from jax.experimental.pallas import tpu as pltpu

HIDDEN = 128


def critic_kernel(s_ref, a_ref, w1s_ref, w1a_ref, w2_ref, aux_ref, o_ref):
    H = w2_ref.shape[0]

    # fc1s^T: (H, S) @ (S, TB) + b1s column  -> (H, TB), relu
    h1s = jnp.dot(w1s_ref[...], s_ref[...], preferred_element_type=jnp.float32)
    h1s = jnp.maximum(h1s + aux_ref[:, 0:1], 0.0)

    # fc1a^T: (H, A) @ (A, TB) + b1a column  -> (H, TB), relu
    h1a = jnp.dot(w1a_ref[...], a_ref[...], preferred_element_type=jnp.float32)
    h1a = jnp.maximum(h1a + aux_ref[:, 1:2], 0.0)

    # fc2^T on the (implicitly concatenated) hidden: split W2^T into the halves
    # that act on h1s / h1a -> no in-kernel concat needed.
    h2 = (jnp.dot(w2_ref[:, 0:H], h1s, preferred_element_type=jnp.float32)
          + jnp.dot(w2_ref[:, H:2 * H], h1a, preferred_element_type=jnp.float32)
          + aux_ref[:, 2:3])
    h2 = jnp.maximum(h2, 0.0)

    # fc3 as VPU multiply (w3 column broadcast over lanes) + sublane (XLU)
    # reduction -> lane-dense (1, TB) result; add scalar b3.
    q = jnp.sum(h2 * aux_ref[:, 3:4], axis=0, keepdims=True) + aux_ref[0:1, 4:5]

    o_ref[...] = q.astype(o_ref.dtype)       # unmasked lane-dense store


def critic_forward(state, action, packed_params, *, tile_b=None):
    """state: (B, S), action: (B, A), packed_params from pack_params()."""
    w1sT, w1aT, w2T, aux = packed_params
    B, S = state.shape
    A = action.shape[1]
    H = w2T.shape[0]

    # Batch lives on the lane (fast) axis -> transpose the tiny input matrices.
    sT = state.astype(jnp.float32).T          # (S, B)
    aT = action.astype(jnp.float32).T         # (A, B)

    # Batch tile: one full-array tile for small/medium batches (no padding, no
    # 128-alignment needed since block == full dim); big lane tiles otherwise to
    # amortize per-grid-step overhead (and give v7x >= 2 tiles to split).
    if tile_b is None:
        if B <= 1024:
            tile_b = B
        else:
            tile_b = 2048 if B >= 4096 else 1024
    n_tiles = pl.cdiv(B, tile_b)
    Bp = n_tiles * tile_b
    if Bp != B:
        sT = jnp.pad(sT, ((0, 0), (0, Bp - B)))
        aT = jnp.pad(aT, ((0, 0), (0, Bp - B)))
        # NOTE: padded columns produce garbage q; sliced off below.

    flops = 2 * Bp * (S * H + A * H + 2 * H * H + H)
    bytes_accessed = 4 * (Bp * (S + A + 1) + H * (S + A + 2 * H) + 5 * H)

    out = pl.pallas_call(
        critic_kernel,
        out_shape=jax.ShapeDtypeStruct((1, Bp), jnp.float32),
        grid=(n_tiles,),
        in_specs=[
            pl.BlockSpec((S, tile_b), lambda i: (0, i)),     # state^T: tiled over batch lanes
            pl.BlockSpec((A, tile_b), lambda i: (0, i)),     # action^T: tiled over batch lanes
            pl.BlockSpec((H, S), lambda i: (0, 0)),          # W1s^T: VMEM resident
            pl.BlockSpec((H, A), lambda i: (0, 0)),          # W1a^T: VMEM resident
            pl.BlockSpec((H, 2 * H), lambda i: (0, 0)),      # W2^T:  VMEM resident
            pl.BlockSpec((H, 5), lambda i: (0, 0)),          # [b1s|b1a|b2|w3|b3] columns
        ],
        out_specs=pl.BlockSpec((1, tile_b), lambda i: (0, i)),   # lane-dense q
        compiler_params=pltpu.CompilerParams(
            dimension_semantics=("parallel",)),
        cost_estimate=pl.CostEstimate(
            flops=flops, transcendentals=0, bytes_accessed=bytes_accessed),
    )(sT, aT, w1sT, w1aT, w2T, aux)

    return out[0, :B].reshape(B, 1)


def init_params(key, state_dim, action_dim, hidden=HIDDEN, init_w=0.003):
    """Raw (unpacked) parameters, weights stored (in_features, out_features)."""
    ks = jax.random.split(key, 8)
    t = 1.0 / np.sqrt(hidden)
    w1s = jax.random.uniform(ks[0], (state_dim, hidden), jnp.float32, -t, t)
    b1s = jax.random.uniform(ks[1], (hidden,), jnp.float32, -t, t)
    w1a = jax.random.uniform(ks[2], (action_dim, hidden), jnp.float32, -t, t)
    b1a = jax.random.uniform(ks[3], (hidden,), jnp.float32, -t, t)
    w2 = jax.random.uniform(ks[4], (2 * hidden, hidden), jnp.float32, -t, t)
    b2 = jax.random.uniform(ks[5], (hidden,), jnp.float32, -t, t)
    # Spec literally does uniform_(init_w, init_w) -> constant weight.
    w3 = jnp.full((hidden,), init_w, jnp.float32)
    b3 = jax.random.uniform(ks[7], (), jnp.float32, -init_w, init_w)
    return (w1s, b1s, w1a, b1a, w2, b2, w3, b3)


def pack_params(raw, state_dim, action_dim, hidden=HIDDEN):
    """Pack raw params into the transposed layout the kernel consumes."""
    w1s, b1s, w1a, b1a, w2, b2, w3, b3 = raw
    w1sT = jnp.asarray(w1s, jnp.float32).T          # (H, S)
    w1aT = jnp.asarray(w1a, jnp.float32).T          # (H, A)
    w2T = jnp.asarray(w2, jnp.float32).T            # (H, 2H)
    # aux columns (H, 5): 0 = b1s, 1 = b1a, 2 = b2, 3 = w3, 4 = b3 (replicated)
    aux = jnp.zeros((hidden, 5), jnp.float32)
    aux = aux.at[:, 0].set(b1s)
    aux = aux.at[:, 1].set(b1a)
    aux = aux.at[:, 2].set(b2)
    aux = aux.at[:, 3].set(w3)
    aux = aux.at[:, 4].set(jnp.full((hidden,), b3, jnp.float32))
    return (w1sT, w1aT, w2T, aux)


def critic_ref(state, action, raw):
    """Pure-JAX reference matching the PyTorch module (f32)."""
    w1s, b1s, w1a, b1a, w2, b2, w3, b3 = raw
    hs = jnp.maximum(state @ w1s + b1s, 0.0)
    ha = jnp.maximum(action @ w1a + b1a, 0.0)
    h = jnp.concatenate([hs, ha], axis=1)
    h2 = jnp.maximum(h @ w2 + b2, 0.0)
    return h2 @ w3[:, None] + b3


if __name__ == "__main__":
    # Pendulum-v0: state_dim = 3, action_dim = 1
    state_dim, action_dim = 3, 1

    key = jax.random.PRNGKey(0)
    k_s, k_a, k_p = jax.random.split(key, 3)

    raw = init_params(k_p, state_dim, action_dim)
    packed = pack_params(raw, state_dim, action_dim)

    # Case 1: small, unaligned batch -> single full-array tile (no padding).
    batch = 16
    state = jax.random.normal(k_s, (batch, state_dim), jnp.float32)
    action = jax.random.normal(k_a, (batch, action_dim), jnp.float32)
    out = jax.block_until_ready(critic_forward(state, action, packed))
    ref = critic_ref(state, action, raw)
    np.testing.assert_allclose(np.asarray(out), np.asarray(ref), rtol=1e-5, atol=1e-5)

    # Case 2: larger batch with an explicit 128-lane tile -> exercises the batch
    # grid (grid=(2,)), pipelining, and lane-dense tiled stores.
    batch2 = 256
    state2 = jax.random.normal(k_s, (batch2, state_dim), jnp.float32)
    action2 = jax.random.normal(k_a, (batch2, action_dim), jnp.float32)
    out2 = jax.block_until_ready(critic_forward(state2, action2, packed, tile_b=128))
    ref2 = critic_ref(state2, action2, raw)
    np.testing.assert_allclose(np.asarray(out2), np.asarray(ref2), rtol=1e-5, atol=1e-5)

    print("KERNEL_OK")
</pallas_src>

<mosaic_0001>
module attributes {stable_mosaic.version = 11 : i64} {
  func.func @critic_kernel(%arg0: i32, %arg1: memref<3x16xf32, #tpu.memory_space<vmem>>, %arg2: memref<1x16xf32, #tpu.memory_space<vmem>>, %arg3: memref<128x3xf32, #tpu.memory_space<vmem>>, %arg4: memref<128x1xf32, #tpu.memory_space<vmem>>, %arg5: memref<128x256xf32, #tpu.memory_space<vmem>>, %arg6: memref<128x5xf32, #tpu.memory_space<vmem>>, %arg7: memref<1x16xf32, #tpu.memory_space<vmem>>) attributes {dimension_semantics = [#tpu.dimension_semantics<parallel>], iteration_bounds = array<i64: 1>, scalar_prefetch = 0 : i64, scratch_operands = 0 : i64, tpu.core_type = #tpu.core_type<tc>, window_params = [{transform_indices = @transform_0, window_bounds = array<i64: 3, 16>}, {transform_indices = @transform_1, window_bounds = array<i64: 1, 16>}, {pipeline_mode = #tpu.pipeline_mode<synchronous>, transform_indices = @transform_2, window_bounds = array<i64: 128, 3>}, {pipeline_mode = #tpu.pipeline_mode<synchronous>, transform_indices = @transform_3, window_bounds = array<i64: 128, 1>}, {pipeline_mode = #tpu.pipeline_mode<synchronous>, transform_indices = @transform_4, window_bounds = array<i64: 128, 256>}, {pipeline_mode = #tpu.pipeline_mode<synchronous>, transform_indices = @transform_5, window_bounds = array<i64: 128, 5>}, {transform_indices = @transform_6, window_bounds = array<i64: 1, 16>}]} {
    %c0 = arith.constant 0 : index
    %c0_0 = arith.constant 0 : index
    %0 = vector.load %arg3[%c0, %c0_0] : memref<128x3xf32, #tpu.memory_space<vmem>>, vector<128x3xf32>
    %c0_1 = arith.constant 0 : index
    %c0_2 = arith.constant 0 : index
    %1 = vector.load %arg1[%c0_1, %c0_2] : memref<3x16xf32, #tpu.memory_space<vmem>>, vector<3x16xf32>
    %cst = arith.constant dense<0.000000e+00> : vector<128x16xf32>
    %2 = tpu.matmul %0, %1, %cst {dimension_numbers = #tpu.dot_dimension_numbers<[1], [0], [0], [1], [0, 0, 1, 1], [], []>} : vector<128x3xf32>, vector<3x16xf32>, vector<128x16xf32> -> vector<128x16xf32>
    %c0_3 = arith.constant 0 : index
    %c0_4 = arith.constant 0 : index
    %3 = vector.load %arg6[%c0_3, %c0_4] : memref<128x5xf32, #tpu.memory_space<vmem>>, vector<128x1xf32>
    %4 = vector.broadcast %3 : vector<128x1xf32> to vector<128x16xf32>
    %5 = arith.addf %2, %4 : vector<128x16xf32>
    %cst_5 = arith.constant 0.000000e+00 : f32
    %6 = vector.broadcast %cst_5 : f32 to vector<128x16xf32>
    %7 = arith.maximumf %5, %6 : vector<128x16xf32>
    %c0_6 = arith.constant 0 : index
    %c0_7 = arith.constant 0 : index
    %8 = vector.load %arg4[%c0_6, %c0_7] : memref<128x1xf32, #tpu.memory_space<vmem>>, vector<128x1xf32>
    %c0_8 = arith.constant 0 : index
    %c0_9 = arith.constant 0 : index
    %9 = vector.load %arg2[%c0_8, %c0_9] : memref<1x16xf32, #tpu.memory_space<vmem>>, vector<1x16xf32>
    %cst_10 = arith.constant dense<0.000000e+00> : vector<128x16xf32>
    %10 = tpu.matmul %8, %9, %cst_10 {dimension_numbers = #tpu.dot_dimension_numbers<[1], [0], [0], [1], [0, 0, 1, 1], [], []>} : vector<128x1xf32>, vector<1x16xf32>, vector<128x16xf32> -> vector<128x16xf32>
    %c0_11 = arith.constant 0 : index
    %c1 = arith.constant 1 : index
    %11 = vector.load %arg6[%c0_11, %c1] : memref<128x5xf32, #tpu.memory_space<vmem>>, vector<128x1xf32>
    %12 = vector.broadcast %11 : vector<128x1xf32> to vector<128x16xf32>
    %13 = arith.addf %10, %12 : vector<128x16xf32>
    %cst_12 = arith.constant 0.000000e+00 : f32
    %14 = vector.broadcast %cst_12 : f32 to vector<128x16xf32>
    %15 = arith.maximumf %13, %14 : vector<128x16xf32>
    %c0_13 = arith.constant 0 : index
    %c0_14 = arith.constant 0 : index
    %16 = vector.load %arg5[%c0_13, %c0_14] : memref<128x256xf32, #tpu.memory_space<vmem>>, vector<128x128xf32>
    %cst_15 = arith.constant dense<0.000000e+00> : vector<128x16xf32>
    %17 = tpu.matmul %16, %7, %cst_15 {dimension_numbers = #tpu.dot_dimension_numbers<[1], [0], [0], [1], [0, 0, 1, 1], [], []>} : vector<128x128xf32>, vector<128x16xf32>, vector<128x16xf32> -> vector<128x16xf32>
    %c0_16 = arith.constant 0 : index
    %c128 = arith.constant 128 : index
    %18 = vector.load %arg5[%c0_16, %c128] : memref<128x256xf32, #tpu.memory_space<vmem>>, vector<128x128xf32>
    %cst_17 = arith.constant dense<0.000000e+00> : vector<128x16xf32>
    %19 = tpu.matmul %18, %15, %cst_17 {dimension_numbers = #tpu.dot_dimension_numbers<[1], [0], [0], [1], [0, 0, 1, 1], [], []>} : vector<128x128xf32>, vector<128x16xf32>, vector<128x16xf32> -> vector<128x16xf32>
    %20 = arith.addf %17, %19 : vector<128x16xf32>
    %c0_18 = arith.constant 0 : index
    %c2 = arith.constant 2 : index
    %21 = vector.load %arg6[%c0_18, %c2] : memref<128x5xf32, #tpu.memory_space<vmem>>, vector<128x1xf32>
    %22 = vector.broadcast %21 : vector<128x1xf32> to vector<128x16xf32>
    %23 = arith.addf %20, %22 : vector<128x16xf32>
    %cst_19 = arith.constant 0.000000e+00 : f32
    %24 = vector.broadcast %cst_19 : f32 to vector<128x16xf32>
    %25 = arith.maximumf %23, %24 : vector<128x16xf32>
    %c0_20 = arith.constant 0 : index
    %c3 = arith.constant 3 : index
    %26 = vector.load %arg6[%c0_20, %c3] : memref<128x5xf32, #tpu.memory_space<vmem>>, vector<128x1xf32>
    %27 = vector.broadcast %26 : vector<128x1xf32> to vector<128x16xf32>
    %28 = arith.mulf %25, %27 : vector<128x16xf32>
    %cst_21 = arith.constant dense<0.000000e+00> : vector<16xf32>
    %29 = vector.multi_reduction <add>, %28, %cst_21 [0] : vector<128x16xf32> to vector<16xf32>
    %30 = vector.shape_cast %29 : vector<16xf32> to vector<1x16xf32>
    %c0_22 = arith.constant 0 : index
    %c4 = arith.constant 4 : index
    %31 = vector.load %arg6[%c0_22, %c4] : memref<128x5xf32, #tpu.memory_space<vmem>>, vector<1x1xf32>
    %32 = vector.broadcast %31 : vector<1x1xf32> to vector<1x16xf32>
    %33 = arith.addf %30, %32 : vector<1x16xf32>
    %c0_23 = arith.constant 0 : index
    %c0_24 = arith.constant 0 : index
    %34 = vector.load %arg7[%c0_23, %c0_24] : memref<1x16xf32, #tpu.memory_space<vmem>>, vector<1x16xf32>
    tpu.vector_store %arg7[%c0_23, %c0_24], %33 {strides = array<i32>} : memref<1x16xf32, #tpu.memory_space<vmem>>, vector<1x16xf32>,
    return
  }
  func.func @transform_0(%arg0: i32) -> (i32, i32) {
    %c0_i32 = arith.constant 0 : i32
    %c0_i32_0 = arith.constant 0 : i32
    return %c0_i32, %arg0 : i32, i32
  }
  func.func @transform_1(%arg0: i32) -> (i32, i32) {
    %c0_i32 = arith.constant 0 : i32
    %c0_i32_0 = arith.constant 0 : i32
    return %c0_i32, %arg0 : i32, i32
  }
  func.func @transform_2(%arg0: i32) -> (i32, i32) {
    %c0_i32 = arith.constant 0 : i32
    %c0_i32_0 = arith.constant 0 : i32
    %c0_i32_1 = arith.constant 0 : i32
    return %c0_i32, %c0_i32_0 : i32, i32
  }
  func.func @transform_3(%arg0: i32) -> (i32, i32) {
    %c0_i32 = arith.constant 0 : i32
    %c0_i32_0 = arith.constant 0 : i32
    %c0_i32_1 = arith.constant 0 : i32
    return %c0_i32, %c0_i32_0 : i32, i32
  }
  func.func @transform_4(%arg0: i32) -> (i32, i32) {
    %c0_i32 = arith.constant 0 : i32
    %c0_i32_0 = arith.constant 0 : i32
    %c0_i32_1 = arith.constant 0 : i32
    return %c0_i32, %c0_i32_0 : i32, i32
  }
  func.func @transform_5(%arg0: i32) -> (i32, i32) {
    %c0_i32 = arith.constant 0 : i32
    %c0_i32_0 = arith.constant 0 : i32
    %c0_i32_1 = arith.constant 0 : i32
    return %c0_i32, %c0_i32_0 : i32, i32
  }
  func.func @transform_6(%arg0: i32) -> (i32, i32) {
    %c0_i32 = arith.constant 0 : i32
    %c0_i32_0 = arith.constant 0 : i32
    return %c0_i32, %arg0 : i32, i32
  }
}

</mosaic_0001>

<llo_original>
// kernel: tpu_custom_call.1
$region0: #{tpu_custom_call.1}
  #allocation0 [shape = 'u32[]', space=smem, size = 0x4, offset = 0x4, fixed_abs, tag = 'smem constant byte address 0x4 - core index']
  #allocation1 [shape = 'u32[144,128]{1,0:T(1,128)}', space=vmem, size = 0x12000, scoped, tag = 'internal scratch']
  %s0 = inlined_call_operand.vmem [shape: f32[3,16], index: 0, kind: input, shape index: {}]
  %s1 = inlined_call_operand.vmem [shape: f32[1,16], index: 1, kind: input, shape index: {}]
  %s2 = inlined_call_operand.vmem [shape: f32[128,3], index: 2, kind: input, shape index: {}]
  %s3 = inlined_call_operand.vmem [shape: f32[128,1], index: 3, kind: input, shape index: {}]
  %s4 = inlined_call_operand.vmem [shape: f32[128,256], index: 4, kind: input, shape index: {}]
  %s5 = inlined_call_operand.vmem [shape: f32[128,5], index: 5, kind: input, shape index: {}]
  %s6 = inlined_call_operand.hbm [shape: f32[1,16], index: 6, kind: output, shape index: {}]
  %s7 = sld [smem:[#allocation0]]
  $region34: #{tpu_custom_call.1} parent=0
    _
  %s9 = ssub.s32 1, %s7
  %s10 = scalar_select 0, %s9, %s7
  $region1: #{tpu_custom_call.1} parent=0
    #allocation2 [shape = 'u8[512]{0}', space=vmem, size = 0x400, scoped, tag = 'output window, operand 0, single buffered']
    #allocation3 [shape = 's32[1]{0}', space=sflag, size = 0x4, scoped, tag = 'scoped memory for tpu_custom_call.1']
    %11 = vsyncpa [#allocation3], 0
    // Predicated region
    $region2: #{tpu_custom_call.1} parent=1 // pred_check
      _
    $region3: #{tpu_custom_call.1} parent=1 // pred_check_branch
      %13 = sbr.rel (0) target = $region5
    $region4: #{tpu_custom_call.1} parent=1 // pred_region
      _
    $region5: #{tpu_custom_call.1} parent=1 // pred_fallthru
      _
    // Predicated region
    $region6: #{tpu_custom_call.1} parent=1 // pred_check
      _
    $region7: #{tpu_custom_call.1} parent=1 // pred_check_branch
      %15 = sbr.rel (0) target = $region9
    $region8: #{tpu_custom_call.1} parent=1 // pred_region
      _
    $region9: #{tpu_custom_call.1} parent=1 // pred_fallthru
      _
    // Predicated region
    $region10: #{tpu_custom_call.1} parent=1 // pred_check
      _
    $region11: #{tpu_custom_call.1} parent=1 // pred_check_branch
      %17 = sbr.rel (0) target = $region13
    $region12: #{tpu_custom_call.1} parent=1 // pred_region
      _
    $region13: #{tpu_custom_call.1} parent=1 // pred_fallthru
      _
    // Predicated region
    $region14: #{tpu_custom_call.1} parent=1 // pred_check
      _
    $region15: #{tpu_custom_call.1} parent=1 // pred_check_branch
      %19 = sbr.rel (0) target = $region17
    $region16: #{tpu_custom_call.1} parent=1 // pred_region
      _
    $region17: #{tpu_custom_call.1} parent=1 // pred_fallthru
      _
    // Predicated region
    $region18: #{tpu_custom_call.1} parent=1 // pred_check
      _
    $region19: #{tpu_custom_call.1} parent=1 // pred_check_branch
      %21 = sbr.rel (0) target = $region21
    $region20: #{tpu_custom_call.1} parent=1 // pred_region
      _
    $region21: #{tpu_custom_call.1} parent=1 // pred_fallthru
      _
    // Predicated region
    $region22: #{tpu_custom_call.1} parent=1 // pred_check
      _
    $region23: #{tpu_custom_call.1} parent=1 // pred_check_branch
      %23 = sbr.rel (0) target = $region25
    $region24: #{tpu_custom_call.1} parent=1 // pred_region
      _
    $region25: #{tpu_custom_call.1} parent=1 // pred_fallthru
      _
    %v24 = vld [vmem:[%s2] sm:$0xff]
    %v25 = vld [vmem:[%s2 + $0x8] sm:$0xff]
    %v26 = vld [vmem:[%s2 + $0x10] sm:$0xff]
    %v27 = vld [vmem:[%s2 + $0x18] sm:$0xff]
    %v28 = vld [vmem:[%s2 + $0x20] sm:$0xff]
    %v29 = vld [vmem:[%s2 + $0x28] sm:$0xff]
    %v30 = vld [vmem:[%s2 + $0x30] sm:$0xff]
    %v31 = vld [vmem:[%s2 + $0x38] sm:$0xff]
    %v32 = vld [vmem:[%s2 + $0x40] sm:$0xff]
    %v33 = vld [vmem:[%s2 + $0x48] sm:$0xff]
    %v34 = vld [vmem:[%s2 + $0x50] sm:$0xff]
    %v35 = vld [vmem:[%s2 + $0x58] sm:$0xff]
    %v36 = vld [vmem:[%s2 + $0x60] sm:$0xff]
    %v37 = vld [vmem:[%s2 + $0x68] sm:$0xff]
    %v38 = vld [vmem:[%s2 + $0x70] sm:$0xff]
    %v39 = vld [vmem:[%s2 + $0x78] sm:$0xff]
    %v40 = vld [vmem:[%s0] sm:$0x7]
    %v41 = vld [vmem:[%s5] sm:$0xff]
    %v42 = vld [vmem:[%s5 + $0x8] sm:$0xff]
    %v43 = vld [vmem:[%s5 + $0x10] sm:$0xff]
    %v44 = vld [vmem:[%s5 + $0x18] sm:$0xff]
    %v45 = vld [vmem:[%s5 + $0x20] sm:$0xff]
    %v46 = vld [vmem:[%s5 + $0x28] sm:$0xff]
    %v47 = vld [vmem:[%s5 + $0x30] sm:$0xff]
    %v48 = vld [vmem:[%s5 + $0x38] sm:$0xff]
    %v49 = vld [vmem:[%s5 + $0x40] sm:$0xff]
    %v50 = vld [vmem:[%s5 + $0x48] sm:$0xff]
    %v51 = vld [vmem:[%s5 + $0x50] sm:$0xff]
    %v52 = vld [vmem:[%s5 + $0x58] sm:$0xff]
    %v53 = vld [vmem:[%s5 + $0x60] sm:$0xff]
    %v54 = vld [vmem:[%s5 + $0x68] sm:$0xff]
    %v55 = vld [vmem:[%s5 + $0x70] sm:$0xff]
    %v56 = vld [vmem:[%s5 + $0x78] sm:$0xff]
    %58 = vset.pattern.permute.xlu0 0
    %59 = vperm.xlu0 %58, %v41
    %v60 = vpop.permute.xlu0 %59
    %63 = vset.pattern.permute.xlu0 0
    %64 = vperm.xlu0 %63, %v42
    %v65 = vpop.permute.xlu0 %64
    %68 = vset.pattern.permute.xlu0 0
    %69 = vperm.xlu0 %68, %v43
    %v70 = vpop.permute.xlu0 %69
    %73 = vset.pattern.permute.xlu0 0
    %74 = vperm.xlu0 %73, %v44
    %v75 = vpop.permute.xlu0 %74
    %78 = vset.pattern.permute.xlu0 0
    %79 = vperm.xlu0 %78, %v45
    %v80 = vpop.permute.xlu0 %79
    %83 = vset.pattern.permute.xlu0 0
    %84 = vperm.xlu0 %83, %v46
    %v85 = vpop.permute.xlu0 %84
    %88 = vset.pattern.permute.xlu0 0
    %89 = vperm.xlu0 %88, %v47
    %v90 = vpop.permute.xlu0 %89
    %93 = vset.pattern.permute.xlu0 0
    %94 = vperm.xlu0 %93, %v48
    %v95 = vpop.permute.xlu0 %94
    %98 = vset.pattern.permute.xlu0 0
    %99 = vperm.xlu0 %98, %v49
    %v100 = vpop.permute.xlu0 %99
    %103 = vset.pattern.permute.xlu0 0
    %104 = vperm.xlu0 %103, %v50
    %v105 = vpop.permute.xlu0 %104
    %108 = vset.pattern.permute.xlu0 0
    %109 = vperm.xlu0 %108, %v51
    %v110 = vpop.permute.xlu0 %109
    %113 = vset.pattern.permute.xlu0 0
    %114 = vperm.xlu0 %113, %v52
    %v115 = vpop.permute.xlu0 %114
    %118 = vset.pattern.permute.xlu0 0
    %119 = vperm.xlu0 %118, %v53
    %v120 = vpop.permute.xlu0 %119
    %123 = vset.pattern.permute.xlu0 0
    %124 = vperm.xlu0 %123, %v54
    %v125 = vpop.permute.xlu0 %124
    %128 = vset.pattern.permute.xlu0 0
    %129 = vperm.xlu0 %128, %v55
    %v130 = vpop.permute.xlu0 %129
    %133 = vset.pattern.permute.xlu0 0
    %134 = vperm.xlu0 %133, %v56
    %v135 = vpop.permute.xlu0 %134
    %vm137 = vcmask 23552
    %v139 = vsel %vm137, %v24, 0
    %v142 = vsel %vm137, %v25, 0
    %v145 = vsel %vm137, %v26, 0
    %v148 = vsel %vm137, %v27, 0
    %v151 = vsel %vm137, %v28, 0
    %v154 = vsel %vm137, %v29, 0
    %v157 = vsel %vm137, %v30, 0
    %v160 = vsel %vm137, %v31, 0
    %v163 = vsel %vm137, %v32, 0
    %v166 = vsel %vm137, %v33, 0
    %v169 = vsel %vm137, %v34, 0
    %v172 = vsel %vm137, %v35, 0
    %v175 = vsel %vm137, %v36, 0
    %v178 = vsel %vm137, %v37, 0
    %v181 = vsel %vm137, %v38, 0
    %v184 = vsel %vm137, %v39, 0
    %vm186 = vcmask 1042432
    %v188 = vsel %vm186, %v40, 0
    %190 = vmatprep.subr.mxu0 0.0
    %191 = vmatpush1.msra.mxu0 0.0
    %192 = vmatprep.subr.mxu0 0.0
    %193 = vmatpush1.msra.mxu0 0.0
    %194 = vmatprep.subr.mxu0 0.0
    %195 = vmatpush1.msra.mxu0 0.0
    %196 = vmatprep.subr.mxu0 0.0
    %197 = vmatpush1.msra.mxu0 0.0
    %198 = vmatprep.subr.mxu0 0.0
    %199 = vmatpush1.msra.mxu0 0.0
    %200 = vmatprep.subr.mxu0 0.0
    %201 = vmatpush1.msra.mxu0 0.0
    %202 = vmatprep.subr.mxu0 0.0
    %203 = vmatpush1.msra.mxu0 0.0
    %204 = vmatprep.subr.mxu0 0.0
    %205 = vmatpush1.msra.mxu0 0.0
    %206 = vmatprep.subr.mxu0 0.0
    %207 = vmatpush1.msra.mxu0 0.0
    %208 = vmatprep.subr.mxu0 0.0
    %209 = vmatpush1.msra.mxu0 0.0
    %210 = vmatprep.subr.mxu0 0.0
    %211 = vmatpush1.msra.mxu0 0.0
    %212 = vmatprep.subr.mxu0 0.0
    %213 = vmatpush1.msra.mxu0 0.0
    %214 = vmatprep.subr.mxu0 0.0
    %215 = vmatpush1.msra.mxu0 0.0
    %216 = vmatprep.subr.mxu0 0.0
    %217 = vmatpush1.msra.mxu0 0.0
    %218 = vmatprep.subr.mxu0 0.0
    %219 = vmatpush1.msra.mxu0 0.0
    %220 = vmatprep.subr.mxu0 0.0
    %221 = vmatpush1.msra.mxu0 %v188
    %222 = vmatprep.subr.mxu0 0.0
    %223 = vmatpush2.msra.mxu0 0.0
    %224 = vmatprep.subr.mxu0 0.0
    %225 = vmatpush2.msra.mxu0 0.0
    %226 = vmatprep.subr.mxu0 0.0
    %227 = vmatpush2.msra.mxu0 0.0
    %228 = vmatprep.subr.mxu0 0.0
    %229 = vmatpush2.msra.mxu0 0.0
    %230 = vmatprep.subr.mxu0 0.0
    %231 = vmatpush2.msra.mxu0 0.0
    %232 = vmatprep.subr.mxu0 0.0
    %233 = vmatpush2.msra.mxu0 0.0
    %234 = vmatprep.subr.mxu0 0.0
    %235 = vmatpush2.msra.mxu0 0.0
    %236 = vmatprep.subr.mxu0 0.0
    %237 = vmatpush2.msra.mxu0 0.0
    %238 = vmatprep.subr.mxu0 0.0
    %239 = vmatpush2.msra.mxu0 0.0
    %240 = vmatprep.subr.mxu0 0.0
    %241 = vmatpush2.msra.mxu0 0.0
    %242 = vmatprep.subr.mxu0 0.0
    %243 = vmatpush2.msra.mxu0 0.0
    %244 = vmatprep.subr.mxu0 0.0
    %245 = vmatpush2.msra.mxu0 0.0
    %246 = vmatprep.subr.mxu0 0.0
    %247 = vmatpush2.msra.mxu0 0.0
    %248 = vmatprep.subr.mxu0 0.0
    %249 = vmatpush2.msra.mxu0 0.0
    %250 = vmatprep.subr.mxu0 0.0
    %251 = vmatpush2.msra.mxu0 0.0
    %252 = vmatprep.subr.mxu0 0.0
    %253 = vmatpush2.msra.mxu0 0.0
    %254 = vmatprep.mubr.f32.mxu0 0.0
    %255 = vmatmul.mubr.f32.gmra.mxu0 %v139
    %v256 = vpop.f32.mrf.mxu0
    %v257 = vadd.f32 %v60, %v256
    %v258 = vpop.f32.mrf.mxu0
    %259 = vmatprep.mubr.f32.mxu0 0.0
    %260 = vmatmul.mubr.f32.gmra.mxu0 %v142
    %v261 = vpop.f32.mrf.mxu0
    %v262 = vadd.f32 %v65, %v261
    %v263 = vpop.f32.mrf.mxu0
    %264 = vmatprep.mubr.f32.mxu0 0.0
    %265 = vmatmul.mubr.f32.gmra.mxu0 %v145
    %v266 = vpop.f32.mrf.mxu0
    %v267 = vadd.f32 %v70, %v266
    %v268 = vpop.f32.mrf.mxu0
    %269 = vmatprep.mubr.f32.mxu0 0.0
    %270 = vmatmul.mubr.f32.gmra.mxu0 %v148
    %v271 = vpop.f32.mrf.mxu0
    %v272 = vadd.f32 %v75, %v271
    %v273 = vpop.f32.mrf.mxu0
    %274 = vmatprep.mubr.f32.mxu0 0.0
    %275 = vmatmul.mubr.f32.gmra.mxu0 %v151
    %v276 = vpop.f32.mrf.mxu0
    %v277 = vadd.f32 %v80, %v276
    %v278 = vpop.f32.mrf.mxu0
    %279 = vmatprep.mubr.f32.mxu0 0.0
    %280 = vmatmul.mubr.f32.gmra.mxu0 %v154
    %v281 = vpop.f32.mrf.mxu0
    %v282 = vadd.f32 %v85, %v281
    %v283 = vpop.f32.mrf.mxu0
    %284 = vmatprep.mubr.f32.mxu0 0.0
    %285 = vmatmul.mubr.f32.gmra.mxu0 %v157
    %v286 = vpop.f32.mrf.mxu0
    %v287 = vadd.f32 %v90, %v286
    %v288 = vpop.f32.mrf.mxu0
    %289 = vmatprep.mubr.f32.mxu0 0.0
    %290 = vmatmul.mubr.f32.gmra.mxu0 %v160
    %v291 = vpop.f32.mrf.mxu0
    %v292 = vadd.f32 %v95, %v291
    %v293 = vpop.f32.mrf.mxu0
    %294 = vmatprep.mubr.f32.mxu0 0.0
    %295 = vmatmul.mubr.f32.gmra.mxu0 %v163
    %v296 = vpop.f32.mrf.mxu0
    %v297 = vadd.f32 %v100, %v296
    %v298 = vpop.f32.mrf.mxu0
    %299 = vmatprep.mubr.f32.mxu0 0.0
    %300 = vmatmul.mubr.f32.gmra.mxu0 %v166
    %v301 = vpop.f32.mrf.mxu0
    %v302 = vadd.f32 %v105, %v301
    %v303 = vpop.f32.mrf.mxu0
    %304 = vmatprep.mubr.f32.mxu0 0.0
    %305 = vmatmul.mubr.f32.gmra.mxu0 %v169
    %v306 = vpop.f32.mrf.mxu0
    %v307 = vadd.f32 %v110, %v306
    %v308 = vpop.f32.mrf.mxu0
    %309 = vmatprep.mubr.f32.mxu0 0.0
    %310 = vmatmul.mubr.f32.gmra.mxu0 %v172
    %v311 = vpop.f32.mrf.mxu0
    %v312 = vadd.f32 %v115, %v311
    %v313 = vpop.f32.mrf.mxu0
    %314 = vmatprep.mubr.f32.mxu0 0.0
    %315 = vmatmul.mubr.f32.gmra.mxu0 %v175
    %v316 = vpop.f32.mrf.mxu0
    %v317 = vadd.f32 %v120, %v316
    %v318 = vpop.f32.mrf.mxu0
    %319 = vmatprep.mubr.f32.mxu0 0.0
    %320 = vmatmul.mubr.f32.gmra.mxu0 %v178
    %v321 = vpop.f32.mrf.mxu0
    %v322 = vadd.f32 %v125, %v321
    %v323 = vpop.f32.mrf.mxu0
    %324 = vmatprep.mubr.f32.mxu0 0.0
    %325 = vmatmul.mubr.f32.gmra.mxu0 %v181
    %v326 = vpop.f32.mrf.mxu0
    %v327 = vadd.f32 %v130, %v326
    %v328 = vpop.f32.mrf.mxu0
    %329 = vmatprep.mubr.f32.mxu0 0.0
    %330 = vmatmul.mubr.f32.gmra.mxu0 %v184
    %v331 = vpop.f32.mrf.mxu0
    %v332 = vadd.f32 %v135, %v331
    %v333 = vpop.f32.mrf.mxu0
    %334 = vdwg.mxu0
    %v335 = vmax.f32 %v257, 0.0
    %v336 = vmax.f32 %v262, 0.0
    %v337 = vmax.f32 %v267, 0.0
    %v338 = vmax.f32 %v272, 0.0
    %v339 = vmax.f32 %v277, 0.0
    %v340 = vmax.f32 %v282, 0.0
    %v341 = vmax.f32 %v287, 0.0
    %v342 = vmax.f32 %v292, 0.0
    %v343 = vmax.f32 %v297, 0.0
    %v344 = vmax.f32 %v302, 0.0
    %v345 = vmax.f32 %v307, 0.0
    %v346 = vmax.f32 %v312, 0.0
    %v347 = vmax.f32 %v317, 0.0
    %v348 = vmax.f32 %v322, 0.0
    %v349 = vmax.f32 %v327, 0.0
    %v350 = vmax.f32 %v332, 0.0
    %v351 = vld [vmem:[%s3] sm:$0xff]
    %v352 = vld [vmem:[%s3 + $0x8] sm:$0xff]
    %v353 = vld [vmem:[%s3 + $0x10] sm:$0xff]
    %v354 = vld [vmem:[%s3 + $0x18] sm:$0xff]
    %v355 = vld [vmem:[%s3 + $0x20] sm:$0xff]
    %v356 = vld [vmem:[%s3 + $0x28] sm:$0xff]
    %v357 = vld [vmem:[%s3 + $0x30] sm:$0xff]
    %v358 = vld [vmem:[%s3 + $0x38] sm:$0xff]
    %v359 = vld [vmem:[%s3 + $0x40] sm:$0xff]
    %v360 = vld [vmem:[%s3 + $0x48] sm:$0xff]
    %v361 = vld [vmem:[%s3 + $0x50] sm:$0xff]
    %v362 = vld [vmem:[%s3 + $0x58] sm:$0xff]
    %v363 = vld [vmem:[%s3 + $0x60] sm:$0xff]
    %v364 = vld [vmem:[%s3 + $0x68] sm:$0xff]
    %v365 = vld [vmem:[%s3 + $0x70] sm:$0xff]
    %v366 = vld [vmem:[%s3 + $0x78] sm:$0xff]
    %v367 = vld [vmem:[%s1] sm:$0x1]
    %368 = vset.pattern.permute.xlu0 1
    %369 = vperm.xlu0 %368, %v41
    %v370 = vpop.permute.xlu0 %369
    %372 = vset.pattern.permute.xlu0 1
    %373 = vperm.xlu0 %372, %v42
    %v374 = vpop.permute.xlu0 %373
    %376 = vset.pattern.permute.xlu0 1
    %377 = vperm.xlu0 %376, %v43
    %v378 = vpop.permute.xlu0 %377
    %380 = vset.pattern.permute.xlu0 1
    %381 = vperm.xlu0 %380, %v44
    %v382 = vpop.permute.xlu0 %381
    %384 = vset.pattern.permute.xlu0 1
    %385 = vperm.xlu0 %384, %v45
    %v386 = vpop.permute.xlu0 %385
    %388 = vset.pattern.permute.xlu0 1
    %389 = vperm.xlu0 %388, %v46
    %v390 = vpop.permute.xlu0 %389
    %392 = vset.pattern.permute.xlu0 1
    %393 = vperm.xlu0 %392, %v47
    %v394 = vpop.permute.xlu0 %393
    %396 = vset.pattern.permute.xlu0 1
    %397 = vperm.xlu0 %396, %v48
    %v398 = vpop.permute.xlu0 %397
    %400 = vset.pattern.permute.xlu0 1
    %401 = vperm.xlu0 %400, %v49
    %v402 = vpop.permute.xlu0 %401
    %404 = vset.pattern.permute.xlu0 1
    %405 = vperm.xlu0 %404, %v50
    %v406 = vpop.permute.xlu0 %405
    %408 = vset.pattern.permute.xlu0 1
    %409 = vperm.xlu0 %408, %v51
    %v410 = vpop.permute.xlu0 %409
    %412 = vset.pattern.permute.xlu0 1
    %413 = vperm.xlu0 %412, %v52
    %v414 = vpop.permute.xlu0 %413
    %416 = vset.pattern.permute.xlu0 1
    %417 = vperm.xlu0 %416, %v53
    %v418 = vpop.permute.xlu0 %417
    %420 = vset.pattern.permute.xlu0 1
    %421 = vperm.xlu0 %420, %v54
    %v422 = vpop.permute.xlu0 %421
    %424 = vset.pattern.permute.xlu0 1
    %425 = vperm.xlu0 %424, %v55
    %v426 = vpop.permute.xlu0 %425
    %428 = vset.pattern.permute.xlu0 1
    %429 = vperm.xlu0 %428, %v56
    %v430 = vpop.permute.xlu0 %429
    %vm432 = vcmask 7168
    %v434 = vsel %vm432, %v351, 0
    %v437 = vsel %vm432, %v352, 0
    %v440 = vsel %vm432, %v353, 0
    %v443 = vsel %vm432, %v354, 0
    %v446 = vsel %vm432, %v355, 0
    %v449 = vsel %vm432, %v356, 0
    %v452 = vsel %vm432, %v357, 0
    %v455 = vsel %vm432, %v358, 0
    %v458 = vsel %vm432, %v359, 0
    %v461 = vsel %vm432, %v360, 0
    %v464 = vsel %vm432, %v361, 0
    %v467 = vsel %vm432, %v362, 0
    %v470 = vsel %vm432, %v363, 0
    %v473 = vsel %vm432, %v364, 0
    %v476 = vsel %vm432, %v365, 0
    %v479 = vsel %vm432, %v366, 0
    %vm481 = vcmask 1040384
    %v483 = vsel %vm481, %v367, 0
    %485 = vmatprep.subr.mxu0 0.0
    %486 = vmatpush1.msra.mxu0 0.0
    %487 = vmatprep.subr.mxu0 0.0
    %488 = vmatpush1.msra.mxu0 0.0
    %489 = vmatprep.subr.mxu0 0.0
    %490 = vmatpush1.msra.mxu0 0.0
    %491 = vmatprep.subr.mxu0 0.0
    %492 = vmatpush1.msra.mxu0 0.0
    %493 = vmatprep.subr.mxu0 0.0
    %494 = vmatpush1.msra.mxu0 0.0
    %495 = vmatprep.subr.mxu0 0.0
    %496 = vmatpush1.msra.mxu0 0.0
    %497 = vmatprep.subr.mxu0 0.0
    %498 = vmatpush1.msra.mxu0 0.0
    %499 = vmatprep.subr.mxu0 0.0
    %500 = vmatpush1.msra.mxu0 0.0
    %501 = vmatprep.subr.mxu0 0.0
    %502 = vmatpush1.msra.mxu0 0.0
    %503 = vmatprep.subr.mxu0 0.0
    %504 = vmatpush1.msra.mxu0 0.0
    %505 = vmatprep.subr.mxu0 0.0
    %506 = vmatpush1.msra.mxu0 0.0
    %507 = vmatprep.subr.mxu0 0.0
    %508 = vmatpush1.msra.mxu0 0.0
    %509 = vmatprep.subr.mxu0 0.0
    %510 = vmatpush1.msra.mxu0 0.0
    %511 = vmatprep.subr.mxu0 0.0
    %512 = vmatpush1.msra.mxu0 0.0
    %513 = vmatprep.subr.mxu0 0.0
    %514 = vmatpush1.msra.mxu0 0.0
    %515 = vmatprep.subr.mxu0 0.0
    %516 = vmatpush1.msra.mxu0 %v483
    %517 = vmatprep.subr.mxu0 0.0
    %518 = vmatpush2.msra.mxu0 0.0
    %519 = vmatprep.subr.mxu0 0.0
    %520 = vmatpush2.msra.mxu0 0.0
    %521 = vmatprep.subr.mxu0 0.0
    %522 = vmatpush2.msra.mxu0 0.0
    %523 = vmatprep.subr.mxu0 0.0
    %524 = vmatpush2.msra.mxu0 0.0
    %525 = vmatprep.subr.mxu0 0.0
    %526 = vmatpush2.msra.mxu0 0.0
    %527 = vmatprep.subr.mxu0 0.0
    %528 = vmatpush2.msra.mxu0 0.0
    %529 = vmatprep.subr.mxu0 0.0
    %530 = vmatpush2.msra.mxu0 0.0
    %531 = vmatprep.subr.mxu0 0.0
    %532 = vmatpush2.msra.mxu0 0.0
    %533 = vmatprep.subr.mxu0 0.0
    %534 = vmatpush2.msra.mxu0 0.0
    %535 = vmatprep.subr.mxu0 0.0
    %536 = vmatpush2.msra.mxu0 0.0
    %537 = vmatprep.subr.mxu0 0.0
    %538 = vmatpush2.msra.mxu0 0.0
    %539 = vmatprep.subr.mxu0 0.0
    %540 = vmatpush2.msra.mxu0 0.0
    %541 = vmatprep.subr.mxu0 0.0
    %542 = vmatpush2.msra.mxu0 0.0
    %543 = vmatprep.subr.mxu0 0.0
    %544 = vmatpush2.msra.mxu0 0.0
    %545 = vmatprep.subr.mxu0 0.0
    %546 = vmatpush2.msra.mxu0 0.0
    %547 = vmatprep.subr.mxu0 0.0
    %548 = vmatpush2.msra.mxu0 0.0
    %549 = vmatprep.mubr.f32.mxu0 0.0
    %550 = vmatmul.mubr.f32.gmra.mxu0 %v434
    %v551 = vpop.f32.mrf.mxu0
    %v552 = vadd.f32 %v370, %v551
    %v553 = vpop.f32.mrf.mxu0
    %554 = vmatprep.mubr.f32.mxu0 0.0
    %555 = vmatmul.mubr.f32.gmra.mxu0 %v437
    %v556 = vpop.f32.mrf.mxu0
    %v557 = vadd.f32 %v374, %v556
    %v558 = vpop.f32.mrf.mxu0
    %559 = vmatprep.mubr.f32.mxu0 0.0
    %560 = vmatmul.mubr.f32.gmra.mxu0 %v440
    %v561 = vpop.f32.mrf.mxu0
    %v562 = vadd.f32 %v378, %v561
    %v563 = vpop.f32.mrf.mxu0
    %564 = vmatprep.mubr.f32.mxu0 0.0
    %565 = vmatmul.mubr.f32.gmra.mxu0 %v443
    %v566 = vpop.f32.mrf.mxu0
    %v567 = vadd.f32 %v382, %v566
    %v568 = vpop.f32.mrf.mxu0
    %569 = vmatprep.mubr.f32.mxu0 0.0
    %570 = vmatmul.mubr.f32.gmra.mxu0 %v446
    %v571 = vpop.f32.mrf.mxu0
    %v572 = vadd.f32 %v386, %v571
    %v573 = vpop.f32.mrf.mxu0
    %574 = vmatprep.mubr.f32.mxu0 0.0
    %575 = vmatmul.mubr.f32.gmra.mxu0 %v449
    %v576 = vpop.f32.mrf.mxu0
    %v577 = vadd.f32 %v390, %v576
    %v578 = vpop.f32.mrf.mxu0
    %579 = vmatprep.mubr.f32.mxu0 0.0
    %580 = vmatmul.mubr.f32.gmra.mxu0 %v452
    %v581 = vpop.f32.mrf.mxu0
    %v582 = vadd.f32 %v394, %v581
    %v583 = vpop.f32.mrf.mxu0
    %584 = vmatprep.mubr.f32.mxu0 0.0
    %585 = vmatmul.mubr.f32.gmra.mxu0 %v455
    %v586 = vpop.f32.mrf.mxu0
    %v587 = vadd.f32 %v398, %v586
    %v588 = vpop.f32.mrf.mxu0
    %589 = vmatprep.mubr.f32.mxu0 0.0
    %590 = vmatmul.mubr.f32.gmra.mxu0 %v458
    %v591 = vpop.f32.mrf.mxu0
    %v592 = vadd.f32 %v402, %v591
    %v593 = vpop.f32.mrf.mxu0
    %594 = vmatprep.mubr.f32.mxu0 0.0
    %595 = vmatmul.mubr.f32.gmra.mxu0 %v461
    %v596 = vpop.f32.mrf.mxu0
    %v597 = vadd.f32 %v406, %v596
    %v598 = vpop.f32.mrf.mxu0
    %599 = vmatprep.mubr.f32.mxu0 0.0
    %600 = vmatmul.mubr.f32.gmra.mxu0 %v464
    %v601 = vpop.f32.mrf.mxu0
    %v602 = vadd.f32 %v410, %v601
    %v603 = vpop.f32.mrf.mxu0
    %604 = vmatprep.mubr.f32.mxu0 0.0
    %605 = vmatmul.mubr.f32.gmra.mxu0 %v467
    %v606 = vpop.f32.mrf.mxu0
    %v607 = vadd.f32 %v414, %v606
    %v608 = vpop.f32.mrf.mxu0
    %609 = vmatprep.mubr.f32.mxu0 0.0
    %610 = vmatmul.mubr.f32.gmra.mxu0 %v470
    %v611 = vpop.f32.mrf.mxu0
    %v612 = vadd.f32 %v418, %v611
    %v613 = vpop.f32.mrf.mxu0
    %614 = vmatprep.mubr.f32.mxu0 0.0
    %615 = vmatmul.mubr.f32.gmra.mxu0 %v473
    %v616 = vpop.f32.mrf.mxu0
    %v617 = vadd.f32 %v422, %v616
    %v618 = vpop.f32.mrf.mxu0
    %619 = vmatprep.mubr.f32.mxu0 0.0
    %620 = vmatmul.mubr.f32.gmra.mxu0 %v476
    %v621 = vpop.f32.mrf.mxu0
    %v622 = vadd.f32 %v426, %v621
    %v623 = vpop.f32.mrf.mxu0
    %624 = vmatprep.mubr.f32.mxu0 0.0
    %625 = vmatmul.mubr.f32.gmra.mxu0 %v479
    %v626 = vpop.f32.mrf.mxu0
    %v627 = vadd.f32 %v430, %v626
    %v628 = vpop.f32.mrf.mxu0
    %629 = vdwg.mxu0
    %v630 = vmax.f32 %v552, 0.0
    %v631 = vmax.f32 %v557, 0.0
    %v632 = vmax.f32 %v562, 0.0
    %v633 = vmax.f32 %v567, 0.0
    %v634 = vmax.f32 %v572, 0.0
    %v635 = vmax.f32 %v577, 0.0
    %v636 = vmax.f32 %v582, 0.0
    %v637 = vmax.f32 %v587, 0.0
    %v638 = vmax.f32 %v592, 0.0
    %v639 = vmax.f32 %v597, 0.0
    %v640 = vmax.f32 %v602, 0.0
    %v641 = vmax.f32 %v607, 0.0
    %v642 = vmax.f32 %v612, 0.0
    %v643 = vmax.f32 %v617, 0.0
    %v644 = vmax.f32 %v622, 0.0
    %v645 = vmax.f32 %v627, 0.0
    %v646 = vld [vmem:[%s4] sm:$0xff]
    %v647 = vld [vmem:[%s4 + $0x10] sm:$0xff]
    %v648 = vld [vmem:[%s4 + $0x20] sm:$0xff]
    %v649 = vld [vmem:[%s4 + $0x30] sm:$0xff]
    %v650 = vld [vmem:[%s4 + $0x40] sm:$0xff]
    %v651 = vld [vmem:[%s4 + $0x50] sm:$0xff]
    %v652 = vld [vmem:[%s4 + $0x60] sm:$0xff]
    %v653 = vld [vmem:[%s4 + $0x70] sm:$0xff]
    %v654 = vld [vmem:[%s4 + $0x80] sm:$0xff]
    %v655 = vld [vmem:[%s4 + $0x90] sm:$0xff]
    %v656 = vld [vmem:[%s4 + $0xa0] sm:$0xff]
    %v657 = vld [vmem:[%s4 + $0xb0] sm:$0xff]
    %v658 = vld [vmem:[%s4 + $0xc0] sm:$0xff]
    %v659 = vld [vmem:[%s4 + $0xd0] sm:$0xff]
    %v660 = vld [vmem:[%s4 + $0xe0] sm:$0xff]
    %v661 = vld [vmem:[%s4 + $0xf0] sm:$0xff]
    %v662 = vld [vmem:[%s4 + $0x8] sm:$0xff]
    %v663 = vld [vmem:[%s4 + $0x18] sm:$0xff]
    %v664 = vld [vmem:[%s4 + $0x28] sm:$0xff]
    %v665 = vld [vmem:[%s4 + $0x38] sm:$0xff]
    %v666 = vld [vmem:[%s4 + $0x48] sm:$0xff]
    %v667 = vld [vmem:[%s4 + $0x58] sm:$0xff]
    %v668 = vld [vmem:[%s4 + $0x68] sm:$0xff]
    %v669 = vld [vmem:[%s4 + $0x78] sm:$0xff]
    %v670 = vld [vmem:[%s4 + $0x88] sm:$0xff]
    %v671 = vld [vmem:[%s4 + $0x98] sm:$0xff]
    %v672 = vld [vmem:[%s4 + $0xa8] sm:$0xff]
    %v673 = vld [vmem:[%s4 + $0xb8] sm:$0xff]
    %v674 = vld [vmem:[%s4 + $0xc8] sm:$0xff]
    %v675 = vld [vmem:[%s4 + $0xd8] sm:$0xff]
    %v676 = vld [vmem:[%s4 + $0xe8] sm:$0xff]
    %v677 = vld [vmem:[%s4 + $0xf8] sm:$0xff]
    %678 = vmatprep.subr.mxu0 0.0
    %679 = vmatpush1.msra.mxu0 %v645
    %680 = vmatprep.subr.mxu0 0.0
    %681 = vmatpush1.msra.mxu0 %v644
    %682 = vmatprep.subr.mxu0 0.0
    %683 = vmatpush1.msra.mxu0 %v643
    %684 = vmatprep.subr.mxu0 0.0
    %685 = vmatpush1.msra.mxu0 %v642
    %686 = vmatprep.subr.mxu0 0.0
    %687 = vmatpush1.msra.mxu0 %v641
    %688 = vmatprep.subr.mxu0 0.0
    %689 = vmatpush1.msra.mxu0 %v640
    %690 = vmatprep.subr.mxu0 0.0
    %691 = vmatpush1.msra.mxu0 %v639
    %692 = vmatprep.subr.mxu0 0.0
    %693 = vmatpush1.msra.mxu0 %v638
    %694 = vmatprep.subr.mxu0 0.0
    %695 = vmatpush1.msra.mxu0 %v637
    %696 = vmatprep.subr.mxu0 0.0
    %697 = vmatpush1.msra.mxu0 %v636
    %698 = vmatprep.subr.mxu0 0.0
    %699 = vmatpush1.msra.mxu0 %v635
    %700 = vmatprep.subr.mxu0 0.0
    %701 = vmatpush1.msra.mxu0 %v634
    %702 = vmatprep.subr.mxu0 0.0
    %703 = vmatpush1.msra.mxu0 %v633
    %704 = vmatprep.subr.mxu0 0.0
    %705 = vmatpush1.msra.mxu0 %v632
    %706 = vmatprep.subr.mxu0 0.0
    %707 = vmatpush1.msra.mxu0 %v631
    %708 = vmatprep.subr.mxu0 0.0
    %709 = vmatpush1.msra.mxu0 %v630
    %710 = vmatprep.subr.mxu0 0.0
    %711 = vmatpush2.msra.mxu0 0.0
    %712 = vmatprep.subr.mxu0 0.0
    %713 = vmatpush2.msra.mxu0 0.0
    %714 = vmatprep.subr.mxu0 0.0
    %715 = vmatpush2.msra.mxu0 0.0
    %716 = vmatprep.subr.mxu0 0.0
    %717 = vmatpush2.msra.mxu0 0.0
    %718 = vmatprep.subr.mxu0 0.0
    %719 = vmatpush2.msra.mxu0 0.0
    %720 = vmatprep.subr.mxu0 0.0
    %721 = vmatpush2.msra.mxu0 0.0
    %722 = vmatprep.subr.mxu0 0.0
    %723 = vmatpush2.msra.mxu0 0.0
    %724 = vmatprep.subr.mxu0 0.0
    %725 = vmatpush2.msra.mxu0 0.0
    %726 = vmatprep.subr.mxu0 0.0
    %727 = vmatpush2.msra.mxu0 0.0
    %728 = vmatprep.subr.mxu0 0.0
    %729 = vmatpush2.msra.mxu0 0.0
    %730 = vmatprep.subr.mxu0 0.0
    %731 = vmatpush2.msra.mxu0 0.0
    %732 = vmatprep.subr.mxu0 0.0
    %733 = vmatpush2.msra.mxu0 0.0
    %734 = vmatprep.subr.mxu0 0.0
    %735 = vmatpush2.msra.mxu0 0.0
    %736 = vmatprep.subr.mxu0 0.0
    %737 = vmatpush2.msra.mxu0 0.0
    %738 = vmatprep.subr.mxu0 0.0
    %739 = vmatpush2.msra.mxu0 0.0
    %740 = vmatprep.subr.mxu0 0.0
    %741 = vmatpush2.msra.mxu0 0.0
    %742 = vmatprep.mubr.f32.mxu0 0.0
    %743 = vmatmul.mubr.f32.gmra.mxu0 %v662
    %v744 = vpop.f32.mrf.mxu0
    %v745 = vadd.f32 0.0, %v744
    %v746 = vpop.f32.mrf.mxu0
    %747 = vmatprep.mubr.f32.mxu0 0.0
    %748 = vmatmul.mubr.f32.gmra.mxu0 %v663
    %v749 = vpop.f32.mrf.mxu0
    %v750 = vadd.f32 0.0, %v749
    %v751 = vpop.f32.mrf.mxu0
    %752 = vmatprep.mubr.f32.mxu0 0.0
    %753 = vmatmul.mubr.f32.gmra.mxu0 %v664
    %v754 = vpop.f32.mrf.mxu0
    %v755 = vadd.f32 0.0, %v754
    %v756 = vpop.f32.mrf.mxu0
    %757 = vmatprep.mubr.f32.mxu0 0.0
    %758 = vmatmul.mubr.f32.gmra.mxu0 %v665
    %v759 = vpop.f32.mrf.mxu0
    %v760 = vadd.f32 0.0, %v759
    %v761 = vpop.f32.mrf.mxu0
    %762 = vmatprep.mubr.f32.mxu0 0.0
    %763 = vmatmul.mubr.f32.gmra.mxu0 %v666
    %v764 = vpop.f32.mrf.mxu0
    %v765 = vadd.f32 0.0, %v764
    %v766 = vpop.f32.mrf.mxu0
    %767 = vmatprep.mubr.f32.mxu0 0.0
    %768 = vmatmul.mubr.f32.gmra.mxu0 %v667
    %v769 = vpop.f32.mrf.mxu0
    %v770 = vadd.f32 0.0, %v769
    %v771 = vpop.f32.mrf.mxu0
    %772 = vmatprep.mubr.f32.mxu0 0.0
    %773 = vmatmul.mubr.f32.gmra.mxu0 %v668
    %v774 = vpop.f32.mrf.mxu0
    %v775 = vadd.f32 0.0, %v774
    %v776 = vpop.f32.mrf.mxu0
    %777 = vmatprep.mubr.f32.mxu0 0.0
    %778 = vmatmul.mubr.f32.gmra.mxu0 %v669
    %v779 = vpop.f32.mrf.mxu0
    %v780 = vadd.f32 0.0, %v779
    %v781 = vpop.f32.mrf.mxu0
    %782 = vmatprep.mubr.f32.mxu0 0.0
    %783 = vmatmul.mubr.f32.gmra.mxu0 %v670
    %v784 = vpop.f32.mrf.mxu0
    %v785 = vadd.f32 0.0, %v784
    %v786 = vpop.f32.mrf.mxu0
    %787 = vmatprep.mubr.f32.mxu0 0.0
    %788 = vmatmul.mubr.f32.gmra.mxu0 %v671
    %v789 = vpop.f32.mrf.mxu0
    %v790 = vadd.f32 0.0, %v789
    %v791 = vpop.f32.mrf.mxu0
    %792 = vmatprep.mubr.f32.mxu0 0.0
    %793 = vmatmul.mubr.f32.gmra.mxu0 %v672
    %v794 = vpop.f32.mrf.mxu0
    %v795 = vadd.f32 0.0, %v794
    %v796 = vpop.f32.mrf.mxu0
    %797 = vmatprep.mubr.f32.mxu0 0.0
    %798 = vmatmul.mubr.f32.gmra.mxu0 %v673
    %v799 = vpop.f32.mrf.mxu0
    %v800 = vadd.f32 0.0, %v799
    %v801 = vpop.f32.mrf.mxu0
    %802 = vmatprep.mubr.f32.mxu0 0.0
    %803 = vmatmul.mubr.f32.gmra.mxu0 %v674
    %v804 = vpop.f32.mrf.mxu0
    %v805 = vadd.f32 0.0, %v804
    %v806 = vpop.f32.mrf.mxu0
    %807 = vmatprep.mubr.f32.mxu0 0.0
    %808 = vmatmul.mubr.f32.gmra.mxu0 %v675
    %v809 = vpop.f32.mrf.mxu0
    %v810 = vadd.f32 0.0, %v809
    %v811 = vpop.f32.mrf.mxu0
    %812 = vmatprep.mubr.f32.mxu0 0.0
    %813 = vmatmul.mubr.f32.gmra.mxu0 %v676
    %v814 = vpop.f32.mrf.mxu0
    %v815 = vadd.f32 0.0, %v814
    %v816 = vpop.f32.mrf.mxu0
    %817 = vmatprep.mubr.f32.mxu0 0.0
    %818 = vmatmul.mubr.f32.gmra.mxu0 %v677
    %v819 = vpop.f32.mrf.mxu0
    %v820 = vadd.f32 0.0, %v819
    %v821 = vpop.f32.mrf.mxu0
    %822 = vdwg.mxu0
    %823 = vmatprep.subr.mxu0 0.0
    %824 = vmatpush1.msra.mxu0 %v350
    %825 = vmatprep.subr.mxu0 0.0
    %826 = vmatpush1.msra.mxu0 %v349
    %827 = vmatprep.subr.mxu0 0.0
    %828 = vmatpush1.msra.mxu0 %v348
    %829 = vmatprep.subr.mxu0 0.0
    %830 = vmatpush1.msra.mxu0 %v347
    %831 = vmatprep.subr.mxu0 0.0
    %832 = vmatpush1.msra.mxu0 %v346
    %833 = vmatprep.subr.mxu0 0.0
    %834 = vmatpush1.msra.mxu0 %v345
    %835 = vmatprep.subr.mxu0 0.0
    %836 = vmatpush1.msra.mxu0 %v344
    %837 = vmatprep.subr.mxu0 0.0
    %838 = vmatpush1.msra.mxu0 %v343
    %839 = vmatprep.subr.mxu0 0.0
    %840 = vmatpush1.msra.mxu0 %v342
    %841 = vmatprep.subr.mxu0 0.0
    %842 = vmatpush1.msra.mxu0 %v341
    %843 = vmatprep.subr.mxu0 0.0
    %844 = vmatpush1.msra.mxu0 %v340
    %845 = vmatprep.subr.mxu0 0.0
    %846 = vmatpush1.msra.mxu0 %v339
    %847 = vmatprep.subr.mxu0 0.0
    %848 = vmatpush1.msra.mxu0 %v338
    %849 = vmatprep.subr.mxu0 0.0
    %850 = vmatpush1.msra.mxu0 %v337
    %851 = vmatprep.subr.mxu0 0.0
    %852 = vmatpush1.msra.mxu0 %v336
    %853 = vmatprep.subr.mxu0 0.0
    %854 = vmatpush1.msra.mxu0 %v335
    %855 = vmatprep.subr.mxu0 0.0
    %856 = vmatpush2.msra.mxu0 0.0
    %857 = vmatprep.subr.mxu0 0.0
    %858 = vmatpush2.msra.mxu0 0.0
    %859 = vmatprep.subr.mxu0 0.0
    %860 = vmatpush2.msra.mxu0 0.0
    %861 = vmatprep.subr.mxu0 0.0
    %862 = vmatpush2.msra.mxu0 0.0
    %863 = vmatprep.subr.mxu0 0.0
    %864 = vmatpush2.msra.mxu0 0.0
    %865 = vmatprep.subr.mxu0 0.0
    %866 = vmatpush2.msra.mxu0 0.0
    %867 = vmatprep.subr.mxu0 0.0
    %868 = vmatpush2.msra.mxu0 0.0
    %869 = vmatprep.subr.mxu0 0.0
    %870 = vmatpush2.msra.mxu0 0.0
    %871 = vmatprep.subr.mxu0 0.0
    %872 = vmatpush2.msra.mxu0 0.0
    %873 = vmatprep.subr.mxu0 0.0
    %874 = vmatpush2.msra.mxu0 0.0
    %875 = vmatprep.subr.mxu0 0.0
    %876 = vmatpush2.msra.mxu0 0.0
    %877 = vmatprep.subr.mxu0 0.0
    %878 = vmatpush2.msra.mxu0 0.0
    %879 = vmatprep.subr.mxu0 0.0
    %880 = vmatpush2.msra.mxu0 0.0
    %881 = vmatprep.subr.mxu0 0.0
    %882 = vmatpush2.msra.mxu0 0.0
    %883 = vmatprep.subr.mxu0 0.0
    %884 = vmatpush2.msra.mxu0 0.0
    %885 = vmatprep.subr.mxu0 0.0
    %886 = vmatpush2.msra.mxu0 0.0
    %887 = vmatprep.mubr.f32.mxu0 0.0
    %888 = vmatmul.mubr.f32.gmra.mxu0 %v646
    %v889 = vpop.f32.mrf.mxu0
    %v890 = vadd.f32 %v745, %v889
    %v891 = vpop.f32.mrf.mxu0
    %892 = vmatprep.mubr.f32.mxu0 0.0
    %893 = vmatmul.mubr.f32.gmra.mxu0 %v647
    %v894 = vpop.f32.mrf.mxu0
    %v895 = vadd.f32 %v750, %v894
    %v896 = vpop.f32.mrf.mxu0
    %897 = vmatprep.mubr.f32.mxu0 0.0
    %898 = vmatmul.mubr.f32.gmra.mxu0 %v648
    %v899 = vpop.f32.mrf.mxu0
    %v900 = vadd.f32 %v755, %v899
    %v901 = vpop.f32.mrf.mxu0
    %902 = vmatprep.mubr.f32.mxu0 0.0
    %903 = vmatmul.mubr.f32.gmra.mxu0 %v649
    %v904 = vpop.f32.mrf.mxu0
    %v905 = vadd.f32 %v760, %v904
    %v906 = vpop.f32.mrf.mxu0
    %907 = vmatprep.mubr.f32.mxu0 0.0
    %908 = vmatmul.mubr.f32.gmra.mxu0 %v650
    %v909 = vpop.f32.mrf.mxu0
    %v910 = vadd.f32 %v765, %v909
    %v911 = vpop.f32.mrf.mxu0
    %912 = vmatprep.mubr.f32.mxu0 0.0
    %913 = vmatmul.mubr.f32.gmra.mxu0 %v651
    %v914 = vpop.f32.mrf.mxu0
    %v915 = vadd.f32 %v770, %v914
    %v916 = vpop.f32.mrf.mxu0
    %917 = vmatprep.mubr.f32.mxu0 0.0
    %918 = vmatmul.mubr.f32.gmra.mxu0 %v652
    %v919 = vpop.f32.mrf.mxu0
    %v920 = vadd.f32 %v775, %v919
    %v921 = vpop.f32.mrf.mxu0
    %922 = vmatprep.mubr.f32.mxu0 0.0
    %923 = vmatmul.mubr.f32.gmra.mxu0 %v653
    %v924 = vpop.f32.mrf.mxu0
    %v925 = vadd.f32 %v780, %v924
    %v926 = vpop.f32.mrf.mxu0
    %927 = vmatprep.mubr.f32.mxu0 0.0
    %928 = vmatmul.mubr.f32.gmra.mxu0 %v654
    %v929 = vpop.f32.mrf.mxu0
    %v930 = vadd.f32 %v785, %v929
    %v931 = vpop.f32.mrf.mxu0
    %932 = vmatprep.mubr.f32.mxu0 0.0
    %933 = vmatmul.mubr.f32.gmra.mxu0 %v655
    %v934 = vpop.f32.mrf.mxu0
    %v935 = vadd.f32 %v790, %v934
    %v936 = vpop.f32.mrf.mxu0
    %937 = vmatprep.mubr.f32.mxu0 0.0
    %938 = vmatmul.mubr.f32.gmra.mxu0 %v656
    %v939 = vpop.f32.mrf.mxu0
    %v940 = vadd.f32 %v795, %v939
    %v941 = vpop.f32.mrf.mxu0
    %942 = vmatprep.mubr.f32.mxu0 0.0
    %943 = vmatmul.mubr.f32.gmra.mxu0 %v657
    %v944 = vpop.f32.mrf.mxu0
    %v945 = vadd.f32 %v800, %v944
    %v946 = vpop.f32.mrf.mxu0
    %947 = vmatprep.mubr.f32.mxu0 0.0
    %948 = vmatmul.mubr.f32.gmra.mxu0 %v658
    %v949 = vpop.f32.mrf.mxu0
    %v950 = vadd.f32 %v805, %v949
    %v951 = vpop.f32.mrf.mxu0
    %952 = vmatprep.mubr.f32.mxu0 0.0
    %953 = vmatmul.mubr.f32.gmra.mxu0 %v659
    %v954 = vpop.f32.mrf.mxu0
    %v955 = vadd.f32 %v810, %v954
    %v956 = vpop.f32.mrf.mxu0
    %957 = vmatprep.mubr.f32.mxu0 0.0
    %958 = vmatmul.mubr.f32.gmra.mxu0 %v660
    %v959 = vpop.f32.mrf.mxu0
    %v960 = vadd.f32 %v815, %v959
    %v961 = vpop.f32.mrf.mxu0
    %962 = vmatprep.mubr.f32.mxu0 0.0
    %963 = vmatmul.mubr.f32.gmra.mxu0 %v661
    %v964 = vpop.f32.mrf.mxu0
    %v965 = vadd.f32 %v820, %v964
    %v966 = vpop.f32.mrf.mxu0
    %967 = vdwg.mxu0
    %968 = vset.pattern.permute.xlu0 2
    %969 = vperm.xlu0 %968, %v41
    %v970 = vpop.permute.xlu0 %969
    %972 = vset.pattern.permute.xlu0 2
    %973 = vperm.xlu0 %972, %v42
    %v974 = vpop.permute.xlu0 %973
    %976 = vset.pattern.permute.xlu0 2
    %977 = vperm.xlu0 %976, %v43
    %v978 = vpop.permute.xlu0 %977
    %980 = vset.pattern.permute.xlu0 2
    %981 = vperm.xlu0 %980, %v44
    %v982 = vpop.permute.xlu0 %981
    %984 = vset.pattern.permute.xlu0 2
    %985 = vperm.xlu0 %984, %v45
    %v986 = vpop.permute.xlu0 %985
    %988 = vset.pattern.permute.xlu0 2
    %989 = vperm.xlu0 %988, %v46
    %v990 = vpop.permute.xlu0 %989
    %992 = vset.pattern.permute.xlu0 2
    %993 = vperm.xlu0 %992, %v47
    %v994 = vpop.permute.xlu0 %993
    %996 = vset.pattern.permute.xlu0 2
    %997 = vperm.xlu0 %996, %v48
    %v998 = vpop.permute.xlu0 %997
    %1000 = vset.pattern.permute.xlu0 2
    %1001 = vperm.xlu0 %1000, %v49
    %v1002 = vpop.permute.xlu0 %1001
    %1004 = vset.pattern.permute.xlu0 2
    %1005 = vperm.xlu0 %1004, %v50
    %v1006 = vpop.permute.xlu0 %1005
    %1008 = vset.pattern.permute.xlu0 2
    %1009 = vperm.xlu0 %1008, %v51
    %v1010 = vpop.permute.xlu0 %1009
    %1012 = vset.pattern.permute.xlu0 2
    %1013 = vperm.xlu0 %1012, %v52
    %v1014 = vpop.permute.xlu0 %1013
    %1016 = vset.pattern.permute.xlu0 2
    %1017 = vperm.xlu0 %1016, %v53
    %v1018 = vpop.permute.xlu0 %1017
    %1020 = vset.pattern.permute.xlu0 2
    %1021 = vperm.xlu0 %1020, %v54
    %v1022 = vpop.permute.xlu0 %1021
    %1024 = vset.pattern.permute.xlu0 2
    %1025 = vperm.xlu0 %1024, %v55
    %v1026 = vpop.permute.xlu0 %1025
    %1028 = vset.pattern.permute.xlu0 2
    %1029 = vperm.xlu0 %1028, %v56
    %v1030 = vpop.permute.xlu0 %1029
    %v1032 = vadd.f32 %v890, %v970
    %v1033 = vadd.f32 %v895, %v974
    %v1034 = vadd.f32 %v900, %v978
    %v1035 = vadd.f32 %v905, %v982
    %v1036 = vadd.f32 %v910, %v986
    %v1037 = vadd.f32 %v915, %v990
    %v1038 = vadd.f32 %v920, %v994
    %v1039 = vadd.f32 %v925, %v998
    %v1040 = vadd.f32 %v930, %v1002
    %v1041 = vadd.f32 %v935, %v1006
    %v1042 = vadd.f32 %v940, %v1010
    %v1043 = vadd.f32 %v945, %v1014
    %v1044 = vadd.f32 %v950, %v1018
    %v1045 = vadd.f32 %v955, %v1022
    %v1046 = vadd.f32 %v960, %v1026
    %v1047 = vadd.f32 %v965, %v1030
    %v1048 = vmax.f32 %v1032, 0.0
    %v1049 = vmax.f32 %v1033, 0.0
    %v1050 = vmax.f32 %v1034, 0.0
    %v1051 = vmax.f32 %v1035, 0.0
    %v1052 = vmax.f32 %v1036, 0.0
    %v1053 = vmax.f32 %v1037, 0.0
    %v1054 = vmax.f32 %v1038, 0.0
    %v1055 = vmax.f32 %v1039, 0.0
    %v1056 = vmax.f32 %v1040, 0.0
    %v1057 = vmax.f32 %v1041, 0.0
    %v1058 = vmax.f32 %v1042, 0.0
    %v1059 = vmax.f32 %v1043, 0.0
    %v1060 = vmax.f32 %v1044, 0.0
    %v1061 = vmax.f32 %v1045, 0.0
    %v1062 = vmax.f32 %v1046, 0.0
    %v1063 = vmax.f32 %v1047, 0.0
    %1064 = vset.pattern.permute.xlu0 3
    %1065 = vperm.xlu0 %1064, %v41
    %v1066 = vpop.permute.xlu0 %1065
    %1068 = vset.pattern.permute.xlu0 3
    %1069 = vperm.xlu0 %1068, %v42
    %v1070 = vpop.permute.xlu0 %1069
    %1072 = vset.pattern.permute.xlu0 3
    %1073 = vperm.xlu0 %1072, %v43
    %v1074 = vpop.permute.xlu0 %1073
    %1076 = vset.pattern.permute.xlu0 3
    %1077 = vperm.xlu0 %1076, %v44
    %v1078 = vpop.permute.xlu0 %1077
    %1080 = vset.pattern.permute.xlu0 3
    %1081 = vperm.xlu0 %1080, %v45
    %v1082 = vpop.permute.xlu0 %1081
    %1084 = vset.pattern.permute.xlu0 3
    %1085 = vperm.xlu0 %1084, %v46
    %v1086 = vpop.permute.xlu0 %1085
    %1088 = vset.pattern.permute.xlu0 3
    %1089 = vperm.xlu0 %1088, %v47
    %v1090 = vpop.permute.xlu0 %1089
    %1092 = vset.pattern.permute.xlu0 3
    %1093 = vperm.xlu0 %1092, %v48
    %v1094 = vpop.permute.xlu0 %1093
    %1096 = vset.pattern.permute.xlu0 3
    %1097 = vperm.xlu0 %1096, %v49
    %v1098 = vpop.permute.xlu0 %1097
    %1100 = vset.pattern.permute.xlu0 3
    %1101 = vperm.xlu0 %1100, %v50
    %v1102 = vpop.permute.xlu0 %1101
    %1104 = vset.pattern.permute.xlu0 3
    %1105 = vperm.xlu0 %1104, %v51
    %v1106 = vpop.permute.xlu0 %1105
    %1108 = vset.pattern.permute.xlu0 3
    %1109 = vperm.xlu0 %1108, %v52
    %v1110 = vpop.permute.xlu0 %1109
    %1112 = vset.pattern.permute.xlu0 3
    %1113 = vperm.xlu0 %1112, %v53
    %v1114 = vpop.permute.xlu0 %1113
    %1116 = vset.pattern.permute.xlu0 3
    %1117 = vperm.xlu0 %1116, %v54
    %v1118 = vpop.permute.xlu0 %1117
    %1120 = vset.pattern.permute.xlu0 3
    %1121 = vperm.xlu0 %1120, %v55
    %v1122 = vpop.permute.xlu0 %1121
    %1124 = vset.pattern.permute.xlu0 3
    %1125 = vperm.xlu0 %1124, %v56
    %v1126 = vpop.permute.xlu0 %1125
    %v1128 = vmul.f32 %v1048, %v1066
    %v1129 = vmul.f32 %v1049, %v1070
    %v1130 = vmul.f32 %v1050, %v1074
    %v1131 = vmul.f32 %v1051, %v1078
    %v1132 = vmul.f32 %v1052, %v1082
    %v1133 = vmul.f32 %v1053, %v1086
    %v1134 = vmul.f32 %v1054, %v1090
    %v1135 = vmul.f32 %v1055, %v1094
    %v1136 = vmul.f32 %v1056, %v1098
    %v1137 = vmul.f32 %v1057, %v1102
    %v1138 = vmul.f32 %v1058, %v1106
    %v1139 = vmul.f32 %v1059, %v1110
    %v1140 = vmul.f32 %v1060, %v1114
    %v1141 = vmul.f32 %v1061, %v1118
    %v1142 = vmul.f32 %v1062, %v1122
    %v1143 = vmul.f32 %v1063, %v1126
    %vm1144 = vcmask 130048
    %v1145 = vsel %vm1144, %v1128, 0.0
    %v1146 = vsel %vm1144, %v1129, 0.0
    %v1147 = vadd.f32 %v1145, %v1146
    %v1148 = vsel %vm1144, %v1130, 0.0
    %v1149 = vadd.f32 %v1147, %v1148
    %v1150 = vsel %vm1144, %v1131, 0.0
    %v1151 = vadd.f32 %v1149, %v1150
    %v1152 = vsel %vm1144, %v1132, 0.0
    %v1153 = vadd.f32 %v1151, %v1152
    %v1154 = vsel %vm1144, %v1133, 0.0
    %v1155 = vadd.f32 %v1153, %v1154
    %v1156 = vsel %vm1144, %v1134, 0.0
    %v1157 = vadd.f32 %v1155, %v1156
    %v1158 = vsel %vm1144, %v1135, 0.0
    %v1159 = vadd.f32 %v1157, %v1158
    %v1160 = vsel %vm1144, %v1136, 0.0
    %v1161 = vadd.f32 %v1159, %v1160
    %v1162 = vsel %vm1144, %v1137, 0.0
    %v1163 = vadd.f32 %v1161, %v1162
    %v1164 = vsel %vm1144, %v1138, 0.0
    %v1165 = vadd.f32 %v1163, %v1164
    %v1166 = vsel %vm1144, %v1139, 0.0
    %v1167 = vadd.f32 %v1165, %v1166
    %v1168 = vsel %vm1144, %v1140, 0.0
    %v1169 = vadd.f32 %v1167, %v1168
    %v1170 = vsel %vm1144, %v1141, 0.0
    %v1171 = vadd.f32 %v1169, %v1170
    %v1172 = vsel %vm1144, %v1142, 0.0
    %v1173 = vadd.f32 %v1171, %v1172
    %v1174 = vsel %vm1144, %v1143, 0.0
    %v1175 = vadd.f32 %v1173, %v1174
    %v1176 = vrot.slane %v1175, 4
    %v1177 = vadd.f32 %v1175, %v1176
    %v1178 = vrot.slane %v1177, 2
    %v1179 = vadd.f32 %v1177, %v1178
    %v1180 = vrot.slane %v1179, 1
    %v1181 = vadd.f32 %v1179, %v1180
    %v1182 = vld [vmem:[%s5] sm:$0x1]
    %1184 = vset.pattern.permute.xlu0 4
    %1185 = vperm.xlu0 %1184, %v1182
    %v1186 = vpop.permute.xlu0 %1185
    %v1188 = vadd.f32 %v1181, %v1186
    %vm1189 = vcmask 122880
    %1190 = vst.msk [vmem:[#allocation2] sm:$0x1] %vm1189, %v1188
    // Predicated region
    $region26: #{tpu_custom_call.1} parent=1 // pred_check
      _
    $region27: #{tpu_custom_call.1} parent=1 // pred_check_branch
      %1192 = sbr.rel (0) target = $region29
    $region28: #{tpu_custom_call.1} parent=1 // pred_region
      %s1194 = ssub.s32 16, 16
      %1195 = vsyncadd [#allocation3], %s1194
      %s1197 = sshll.u32 [#allocation2], 4
      %s1198 = int_to_ptr.vmem [resolvable:$true] %s1197
      %1200 = dma.vmem_to_hbm [thread:$0]  %s1198, 16, %s6, [#allocation3]
    $region29: #{tpu_custom_call.1} parent=1 // pred_fallthru
      _
    // Predicated region
    $region30: #{tpu_custom_call.1} parent=1 // pred_check
      _
    $region31: #{tpu_custom_call.1} parent=1 // pred_check_branch
      %1202 = sbr.rel (0) target = $region33
    $region32: #{tpu_custom_call.1} parent=1 // pred_region
      %1203 = dma.done [#allocation3], 16
    $region33: #{tpu_custom_call.1} parent=1 // pred_fallthru
      _
    %1204 = vsyncpa [#allocation3], 1

</llo_original>
